<compile_context>
chip_gen: v7x
topology: tpu7x:2x2x1
jax: 0.10.0
libtpu: 0.0.40
codegen_flags: <defaults>
</compile_context>

<pallas_src>
import functools

import jax
import jax.numpy as jnp
from jax.experimental import pallas as pl
from jax.experimental.pallas import tpu as pltpu

_LANE = 128


def _round_up(a, m):
    return (a + m - 1) // m * m


def _dice_partial_kernel(x_ref, y_ref, acc_ref):
    # x_ref:   (1, C, TR, 128)  prediction tile (f32 or bf16)
    # y_ref:   (1, TR, 128)     integer class labels tile (int8 / int32)
    # acc_ref: (1, 3, C, 128)   f32 lane-partials, VMEM-resident across the
    #                           spatial grid axis (same block index for all s)
    s = pl.program_id(1)

    @pl.when(s == 0)
    def _init():
        acc_ref[...] = jnp.zeros_like(acc_ref)

    y = y_ref[0].astype(jnp.int32)                      # (TR, 128)
    C = x_ref.shape[1]
    for c in range(C):                                  # tiny static loop, C ~ 2..5
        xc = x_ref[0, c].astype(jnp.float32)            # (TR, 128)
        onehot = (y == c).astype(jnp.float32)           # (TR, 128)
        # reduce only over the row (sublane) axis; keep 128 lane-partials
        acc_ref[0, 0, c, :] = acc_ref[0, 0, c, :] + jnp.sum(xc * onehot, axis=0)
        acc_ref[0, 1, c, :] = acc_ref[0, 1, c, :] + jnp.sum(xc, axis=0)
        acc_ref[0, 2, c, :] = acc_ref[0, 2, c, :] + jnp.sum(onehot, axis=0)


@functools.partial(jax.jit, static_argnames=("smooth", "block_rows"))
def memory_efficient_soft_dice_loss(x, y, smooth=1.0, block_rows=512):
    """x: (B, C, *spatial) predictions (f32/bf16), y: (B, *spatial) int labels."""
    B, C = x.shape[0], x.shape[1]
    S = 1
    for d in x.shape[2:]:
        S *= d

    # Spatial pixels laid out as rows of 128 lanes; the row tile TR is a
    # multiple of 32 so int8 label blocks match the (32, 128) packing tile.
    R = pl.cdiv(S, _LANE)
    tr = max(32, min(_round_up(block_rows, 32), _round_up(R, 32)))
    R_pad = _round_up(R, tr)
    S_pad = R_pad * _LANE
    n_s = R_pad // tr

    x_flat = x.reshape(B, C, S)
    y_flat = y.reshape(B, S).astype(jnp.int32)
    pad = S_pad - S
    if pad:
        # Padded pixels: x = 0, label = C (out of range -> one-hot all zero),
        # so they contribute nothing to intersect / sum_pred / sum_gt.
        x_flat = jnp.pad(x_flat, ((0, 0), (0, 0), (0, pad)))
        y_flat = jnp.pad(y_flat, ((0, 0), (0, pad)), constant_values=C)

    label_dtype = jnp.int8 if C < 127 else jnp.int32
    x_t = x_flat.reshape(B, C, R_pad, _LANE)
    y_t = y_flat.reshape(B, R_pad, _LANE).astype(label_dtype)

    cost = pl.CostEstimate(
        flops=int(3 * B * C * S_pad),
        transcendentals=0,
        bytes_accessed=int(
            B * (C * S_pad * x_t.dtype.itemsize
                 + S_pad * y_t.dtype.itemsize
                 + 3 * C * _LANE * 4)),
    )

    partials = pl.pallas_call(
        _dice_partial_kernel,
        out_shape=jax.ShapeDtypeStruct((B, 3, C, _LANE), jnp.float32),
        grid_spec=pltpu.PrefetchScalarGridSpec(
            num_scalar_prefetch=0,
            grid=(B, n_s),
            in_specs=[
                pl.BlockSpec((1, C, tr, _LANE), lambda b, s: (b, 0, s, 0)),
                pl.BlockSpec((1, tr, _LANE), lambda b, s: (b, s, 0)),
            ],
            out_specs=pl.BlockSpec((1, 3, C, _LANE), lambda b, s: (b, 0, 0, 0)),
        ),
        compiler_params=pltpu.CompilerParams(
            dimension_semantics=("parallel", "arbitrary"),
        ),
        cost_estimate=cost,
    )(x_t, y_t)

    sums = jnp.sum(partials, axis=-1)        # (B, 3, C) final lane reduction
    intersect = sums[:, 0, :]
    sum_pred = sums[:, 1, :]
    sum_gt = sums[:, 2, :]

    # batch_dice=False, do_bg=True, loss_mask=None
    denom = jnp.maximum(sum_gt + sum_pred + smooth, 1e-8)
    dc = (2.0 * intersect + smooth) / denom
    return -jnp.mean(dc)


def _reference(x, y, smooth=1.0):
    # Pure-JAX reference mirroring the PyTorch forward (apply_nonlin=None,
    # batch_dice=False, do_bg=True, loss_mask=None).
    C = x.shape[1]
    axes = tuple(range(2, x.ndim))
    y_onehot = jax.nn.one_hot(y, C, axis=1, dtype=jnp.float32)
    xf = x.astype(jnp.float32)
    intersect = jnp.sum(xf * y_onehot, axis=axes)
    sum_pred = jnp.sum(xf, axis=axes)
    sum_gt = jnp.sum(y_onehot, axis=axes)
    dc = (2.0 * intersect + smooth) / jnp.maximum(sum_gt + sum_pred + smooth, 1e-8)
    return -jnp.mean(dc)


if __name__ == "__main__":
    key = jax.random.PRNGKey(0)
    kx, ky = jax.random.split(key)

    # Small but non-trivial: 96x96 gives 72 spatial rows of 128 lanes, which is
    # not a multiple of the 32-row tile -> exercises both the padding path and
    # the multi-step spatial accumulation.
    B, C, H, W = 2, 4, 96, 96
    x = jax.random.uniform(kx, (B, C, H, W), dtype=jnp.float32)
    y = jax.random.randint(ky, (B, H, W), 0, C, dtype=jnp.int32)

    ref = _reference(x, y, smooth=1.0)

    # Multi-step spatial accumulation path (3 grid steps along S).
    loss_tiled = jax.block_until_ready(
        memory_efficient_soft_dice_loss(x, y, smooth=1.0, block_rows=32))
    # Default tile size (single spatial step for this small input).
    loss_default = jax.block_until_ready(
        memory_efficient_soft_dice_loss(x, y, smooth=1.0))

    assert jnp.allclose(loss_tiled, ref, atol=1e-5, rtol=1e-4), (loss_tiled, ref)
    assert jnp.allclose(loss_default, ref, atol=1e-5, rtol=1e-4), (loss_default, ref)

    print("KERNEL_OK")
</pallas_src>

<mosaic_0001>
module attributes {stable_mosaic.version = 11 : i64} {
  func.func @_dice_partial_kernel(%arg0: i32, %arg1: i32, %arg2: memref<1x4x32x128xf32, #tpu.memory_space<vmem>>, %arg3: memref<1x32x128xi8, #tpu.memory_space<vmem>>, %arg4: memref<1x3x4x128xf32, #tpu.memory_space<vmem>>) attributes {dimension_semantics = [#tpu.dimension_semantics<parallel>, #tpu.dimension_semantics<arbitrary>], iteration_bounds = array<i64: 2, 3>, scalar_prefetch = 0 : i64, scratch_operands = 0 : i64, tpu.core_type = #tpu.core_type<tc>, window_params = [{transform_indices = @transform_0, window_bounds = array<i64: 1, 4, 32, 128>}, {transform_indices = @transform_1, window_bounds = array<i64: 1, 32, 128>}, {transform_indices = @transform_2, window_bounds = array<i64: 1, 3, 4, 128>}]} {
    %c0_i32 = arith.constant 0 : i32
    %0 = arith.cmpi eq, %arg1, %c0_i32 : i32
    %1 = arith.extui %0 : i1 to i32
    %c0_i32_0 = arith.constant 0 : i32
    %2 = arith.cmpi ne, %1, %c0_i32_0 : i32
    scf.if %2 {
      %cst_124 = arith.constant 0.000000e+00 : f32
      %118 = vector.broadcast %cst_124 : f32 to vector<1x3x4x128xf32>
      %c0_125 = arith.constant 0 : index
      %c0_126 = arith.constant 0 : index
      %c0_127 = arith.constant 0 : index
      %c0_128 = arith.constant 0 : index
      %119 = vector.load %arg4[%c0_125, %c0_126, %c0_127, %c0_128] : memref<1x3x4x128xf32, #tpu.memory_space<vmem>>, vector<1x3x4x128xf32>
      tpu.vector_store %arg4[%c0_125, %c0_126, %c0_127, %c0_128], %118 {strides = array<i32>} : memref<1x3x4x128xf32, #tpu.memory_space<vmem>>, vector<1x3x4x128xf32>,
    } else {
    }
    %c0 = arith.constant 0 : index
    %c0_1 = arith.constant 0 : index
    %c0_2 = arith.constant 0 : index
    %3 = vector.load %arg3[%c0, %c0_1, %c0_2] : memref<1x32x128xi8, #tpu.memory_space<vmem>>, vector<1x32x128xi8>
    %4 = vector.shape_cast %3 : vector<1x32x128xi8> to vector<32x128xi8>
    %5 = arith.extsi %4 : vector<32x128xi8> to vector<32x128xi32>
    %c0_3 = arith.constant 0 : index
    %c0_4 = arith.constant 0 : index
    %c0_5 = arith.constant 0 : index
    %c0_6 = arith.constant 0 : index
    %6 = vector.load %arg2[%c0_3, %c0_4, %c0_5, %c0_6] : memref<1x4x32x128xf32, #tpu.memory_space<vmem>>, vector<1x1x32x128xf32>
    %7 = vector.shape_cast %6 : vector<1x1x32x128xf32> to vector<32x128xf32>
    %c0_i32_7 = arith.constant 0 : i32
    %8 = vector.broadcast %c0_i32_7 : i32 to vector<32x128xi32>
    %9 = arith.cmpi eq, %5, %8 : vector<32x128xi32>
    %10 = arith.extui %9 : vector<32x128xi1> to vector<32x128xi32>
    %11 = arith.sitofp %10 : vector<32x128xi32> to vector<32x128xf32>
    %c0_8 = arith.constant 0 : index
    %c0_9 = arith.constant 0 : index
    %c0_10 = arith.constant 0 : index
    %c0_11 = arith.constant 0 : index
    %12 = vector.load %arg4[%c0_8, %c0_9, %c0_10, %c0_11] : memref<1x3x4x128xf32, #tpu.memory_space<vmem>>, vector<1x1x1x128xf32>
    %13 = vector.shape_cast %12 : vector<1x1x1x128xf32> to vector<128xf32>
    %14 = arith.mulf %7, %11 : vector<32x128xf32>
    %cst = arith.constant dense<0.000000e+00> : vector<128xf32>
    %15 = vector.multi_reduction <add>, %14, %cst [0] : vector<32x128xf32> to vector<128xf32>
    %16 = arith.addf %13, %15 : vector<128xf32>
    %c0_12 = arith.constant 0 : index
    %c0_13 = arith.constant 0 : index
    %c0_14 = arith.constant 0 : index
    %c0_15 = arith.constant 0 : index
    %17 = vector.load %arg4[%c0_12, %c0_13, %c0_14, %c0_15] : memref<1x3x4x128xf32, #tpu.memory_space<vmem>>, vector<1x1x1x128xf32>
    %18 = vector.shape_cast %17 : vector<1x1x1x128xf32> to vector<128xf32>
    %19 = vector.shape_cast %16 : vector<128xf32> to vector<1x1x1x128xf32>
    tpu.vector_store %arg4[%c0_12, %c0_13, %c0_14, %c0_15], %19 {strides = array<i32>} : memref<1x3x4x128xf32, #tpu.memory_space<vmem>>, vector<1x1x1x128xf32>,
    %c0_16 = arith.constant 0 : index
    %c1 = arith.constant 1 : index
    %c0_17 = arith.constant 0 : index
    %c0_18 = arith.constant 0 : index
    %20 = vector.load %arg4[%c0_16, %c1, %c0_17, %c0_18] : memref<1x3x4x128xf32, #tpu.memory_space<vmem>>, vector<1x1x1x128xf32>
    %21 = vector.shape_cast %20 : vector<1x1x1x128xf32> to vector<128xf32>
    %cst_19 = arith.constant dense<0.000000e+00> : vector<128xf32>
    %22 = vector.multi_reduction <add>, %7, %cst_19 [0] : vector<32x128xf32> to vector<128xf32>
    %23 = arith.addf %21, %22 : vector<128xf32>
    %c0_20 = arith.constant 0 : index
    %c1_21 = arith.constant 1 : index
    %c0_22 = arith.constant 0 : index
    %c0_23 = arith.constant 0 : index
    %24 = vector.load %arg4[%c0_20, %c1_21, %c0_22, %c0_23] : memref<1x3x4x128xf32, #tpu.memory_space<vmem>>, vector<1x1x1x128xf32>
    %25 = vector.shape_cast %24 : vector<1x1x1x128xf32> to vector<128xf32>
    %26 = vector.shape_cast %23 : vector<128xf32> to vector<1x1x1x128xf32>
    tpu.vector_store %arg4[%c0_20, %c1_21, %c0_22, %c0_23], %26 {strides = array<i32>} : memref<1x3x4x128xf32, #tpu.memory_space<vmem>>, vector<1x1x1x128xf32>,
    %c0_24 = arith.constant 0 : index
    %c2 = arith.constant 2 : index
    %c0_25 = arith.constant 0 : index
    %c0_26 = arith.constant 0 : index
    %27 = vector.load %arg4[%c0_24, %c2, %c0_25, %c0_26] : memref<1x3x4x128xf32, #tpu.memory_space<vmem>>, vector<1x1x1x128xf32>
    %28 = vector.shape_cast %27 : vector<1x1x1x128xf32> to vector<128xf32>
    %cst_27 = arith.constant dense<0.000000e+00> : vector<128xf32>
    %29 = vector.multi_reduction <add>, %11, %cst_27 [0] : vector<32x128xf32> to vector<128xf32>
    %30 = arith.addf %28, %29 : vector<128xf32>
    %c0_28 = arith.constant 0 : index
    %c2_29 = arith.constant 2 : index
    %c0_30 = arith.constant 0 : index
    %c0_31 = arith.constant 0 : index
    %31 = vector.load %arg4[%c0_28, %c2_29, %c0_30, %c0_31] : memref<1x3x4x128xf32, #tpu.memory_space<vmem>>, vector<1x1x1x128xf32>
    %32 = vector.shape_cast %31 : vector<1x1x1x128xf32> to vector<128xf32>
    %33 = vector.shape_cast %30 : vector<128xf32> to vector<1x1x1x128xf32>
    tpu.vector_store %arg4[%c0_28, %c2_29, %c0_30, %c0_31], %33 {strides = array<i32>} : memref<1x3x4x128xf32, #tpu.memory_space<vmem>>, vector<1x1x1x128xf32>,
    %c0_32 = arith.constant 0 : index
    %c1_33 = arith.constant 1 : index
    %c0_34 = arith.constant 0 : index
    %c0_35 = arith.constant 0 : index
    %34 = vector.load %arg2[%c0_32, %c1_33, %c0_34, %c0_35] : memref<1x4x32x128xf32, #tpu.memory_space<vmem>>, vector<1x1x32x128xf32>
    %35 = vector.shape_cast %34 : vector<1x1x32x128xf32> to vector<32x128xf32>
    %c1_i32 = arith.constant 1 : i32
    %36 = vector.broadcast %c1_i32 : i32 to vector<32x128xi32>
    %37 = arith.cmpi eq, %5, %36 : vector<32x128xi32>
    %38 = arith.extui %37 : vector<32x128xi1> to vector<32x128xi32>
    %39 = arith.sitofp %38 : vector<32x128xi32> to vector<32x128xf32>
    %c0_36 = arith.constant 0 : index
    %c0_37 = arith.constant 0 : index
    %c1_38 = arith.constant 1 : index
    %c0_39 = arith.constant 0 : index
    %40 = vector.load %arg4[%c0_36, %c0_37, %c1_38, %c0_39] : memref<1x3x4x128xf32, #tpu.memory_space<vmem>>, vector<1x1x1x128xf32>
    %41 = vector.shape_cast %40 : vector<1x1x1x128xf32> to vector<128xf32>
    %42 = arith.mulf %35, %39 : vector<32x128xf32>
    %cst_40 = arith.constant dense<0.000000e+00> : vector<128xf32>
    %43 = vector.multi_reduction <add>, %42, %cst_40 [0] : vector<32x128xf32> to vector<128xf32>
    %44 = arith.addf %41, %43 : vector<128xf32>
    %c0_41 = arith.constant 0 : index
    %c0_42 = arith.constant 0 : index
    %c1_43 = arith.constant 1 : index
    %c0_44 = arith.constant 0 : index
    %45 = vector.load %arg4[%c0_41, %c0_42, %c1_43, %c0_44] : memref<1x3x4x128xf32, #tpu.memory_space<vmem>>, vector<1x1x1x128xf32>
    %46 = vector.shape_cast %45 : vector<1x1x1x128xf32> to vector<128xf32>
    %47 = vector.shape_cast %44 : vector<128xf32> to vector<1x1x1x128xf32>
    tpu.vector_store %arg4[%c0_41, %c0_42, %c1_43, %c0_44], %47 {strides = array<i32>} : memref<1x3x4x128xf32, #tpu.memory_space<vmem>>, vector<1x1x1x128xf32>,
    %c0_45 = arith.constant 0 : index
    %c1_46 = arith.constant 1 : index
    %c1_47 = arith.constant 1 : index
    %c0_48 = arith.constant 0 : index
    %48 = vector.load %arg4[%c0_45, %c1_46, %c1_47, %c0_48] : memref<1x3x4x128xf32, #tpu.memory_space<vmem>>, vector<1x1x1x128xf32>
    %49 = vector.shape_cast %48 : vector<1x1x1x128xf32> to vector<128xf32>
    %cst_49 = arith.constant dense<0.000000e+00> : vector<128xf32>
    %50 = vector.multi_reduction <add>, %35, %cst_49 [0] : vector<32x128xf32> to vector<128xf32>
    %51 = arith.addf %49, %50 : vector<128xf32>
    %c0_50 = arith.constant 0 : index
    %c1_51 = arith.constant 1 : index
    %c1_52 = arith.constant 1 : index
    %c0_53 = arith.constant 0 : index
    %52 = vector.load %arg4[%c0_50, %c1_51, %c1_52, %c0_53] : memref<1x3x4x128xf32, #tpu.memory_space<vmem>>, vector<1x1x1x128xf32>
    %53 = vector.shape_cast %52 : vector<1x1x1x128xf32> to vector<128xf32>
    %54 = vector.shape_cast %51 : vector<128xf32> to vector<1x1x1x128xf32>
    tpu.vector_store %arg4[%c0_50, %c1_51, %c1_52, %c0_53], %54 {strides = array<i32>} : memref<1x3x4x128xf32, #tpu.memory_space<vmem>>, vector<1x1x1x128xf32>,
    %c0_54 = arith.constant 0 : index
    %c2_55 = arith.constant 2 : index
    %c1_56 = arith.constant 1 : index
    %c0_57 = arith.constant 0 : index
    %55 = vector.load %arg4[%c0_54, %c2_55, %c1_56, %c0_57] : memref<1x3x4x128xf32, #tpu.memory_space<vmem>>, vector<1x1x1x128xf32>
    %56 = vector.shape_cast %55 : vector<1x1x1x128xf32> to vector<128xf32>
    %cst_58 = arith.constant dense<0.000000e+00> : vector<128xf32>
    %57 = vector.multi_reduction <add>, %39, %cst_58 [0] : vector<32x128xf32> to vector<128xf32>
    %58 = arith.addf %56, %57 : vector<128xf32>
    %c0_59 = arith.constant 0 : index
    %c2_60 = arith.constant 2 : index
    %c1_61 = arith.constant 1 : index
    %c0_62 = arith.constant 0 : index
    %59 = vector.load %arg4[%c0_59, %c2_60, %c1_61, %c0_62] : memref<1x3x4x128xf32, #tpu.memory_space<vmem>>, vector<1x1x1x128xf32>
    %60 = vector.shape_cast %59 : vector<1x1x1x128xf32> to vector<128xf32>
    %61 = vector.shape_cast %58 : vector<128xf32> to vector<1x1x1x128xf32>
    tpu.vector_store %arg4[%c0_59, %c2_60, %c1_61, %c0_62], %61 {strides = array<i32>} : memref<1x3x4x128xf32, #tpu.memory_space<vmem>>, vector<1x1x1x128xf32>,
    %c0_63 = arith.constant 0 : index
    %c2_64 = arith.constant 2 : index
    %c0_65 = arith.constant 0 : index
    %c0_66 = arith.constant 0 : index
    %62 = vector.load %arg2[%c0_63, %c2_64, %c0_65, %c0_66] : memref<1x4x32x128xf32, #tpu.memory_space<vmem>>, vector<1x1x32x128xf32>
    %63 = vector.shape_cast %62 : vector<1x1x32x128xf32> to vector<32x128xf32>
    %c2_i32 = arith.constant 2 : i32
    %64 = vector.broadcast %c2_i32 : i32 to vector<32x128xi32>
    %65 = arith.cmpi eq, %5, %64 : vector<32x128xi32>
    %66 = arith.extui %65 : vector<32x128xi1> to vector<32x128xi32>
    %67 = arith.sitofp %66 : vector<32x128xi32> to vector<32x128xf32>
    %c0_67 = arith.constant 0 : index
    %c0_68 = arith.constant 0 : index
    %c2_69 = arith.constant 2 : index
    %c0_70 = arith.constant 0 : index
    %68 = vector.load %arg4[%c0_67, %c0_68, %c2_69, %c0_70] : memref<1x3x4x128xf32, #tpu.memory_space<vmem>>, vector<1x1x1x128xf32>
    %69 = vector.shape_cast %68 : vector<1x1x1x128xf32> to vector<128xf32>
    %70 = arith.mulf %63, %67 : vector<32x128xf32>
    %cst_71 = arith.constant dense<0.000000e+00> : vector<128xf32>
    %71 = vector.multi_reduction <add>, %70, %cst_71 [0] : vector<32x128xf32> to vector<128xf32>
    %72 = arith.addf %69, %71 : vector<128xf32>
    %c0_72 = arith.constant 0 : index
    %c0_73 = arith.constant 0 : index
    %c2_74 = arith.constant 2 : index
    %c0_75 = arith.constant 0 : index
    %73 = vector.load %arg4[%c0_72, %c0_73, %c2_74, %c0_75] : memref<1x3x4x128xf32, #tpu.memory_space<vmem>>, vector<1x1x1x128xf32>
    %74 = vector.shape_cast %73 : vector<1x1x1x128xf32> to vector<128xf32>
    %75 = vector.shape_cast %72 : vector<128xf32> to vector<1x1x1x128xf32>
    tpu.vector_store %arg4[%c0_72, %c0_73, %c2_74, %c0_75], %75 {strides = array<i32>} : memref<1x3x4x128xf32, #tpu.memory_space<vmem>>, vector<1x1x1x128xf32>,
    %c0_76 = arith.constant 0 : index
    %c1_77 = arith.constant 1 : index
    %c2_78 = arith.constant 2 : index
    %c0_79 = arith.constant 0 : index
    %76 = vector.load %arg4[%c0_76, %c1_77, %c2_78, %c0_79] : memref<1x3x4x128xf32, #tpu.memory_space<vmem>>, vector<1x1x1x128xf32>
    %77 = vector.shape_cast %76 : vector<1x1x1x128xf32> to vector<128xf32>
    %cst_80 = arith.constant dense<0.000000e+00> : vector<128xf32>
    %78 = vector.multi_reduction <add>, %63, %cst_80 [0] : vector<32x128xf32> to vector<128xf32>
    %79 = arith.addf %77, %78 : vector<128xf32>
    %c0_81 = arith.constant 0 : index
    %c1_82 = arith.constant 1 : index
    %c2_83 = arith.constant 2 : index
    %c0_84 = arith.constant 0 : index
    %80 = vector.load %arg4[%c0_81, %c1_82, %c2_83, %c0_84] : memref<1x3x4x128xf32, #tpu.memory_space<vmem>>, vector<1x1x1x128xf32>
    %81 = vector.shape_cast %80 : vector<1x1x1x128xf32> to vector<128xf32>
    %82 = vector.shape_cast %79 : vector<128xf32> to vector<1x1x1x128xf32>
    tpu.vector_store %arg4[%c0_81, %c1_82, %c2_83, %c0_84], %82 {strides = array<i32>} : memref<1x3x4x128xf32, #tpu.memory_space<vmem>>, vector<1x1x1x128xf32>,
    %c0_85 = arith.constant 0 : index
    %c2_86 = arith.constant 2 : index
    %c2_87 = arith.constant 2 : index
    %c0_88 = arith.constant 0 : index
    %83 = vector.load %arg4[%c0_85, %c2_86, %c2_87, %c0_88] : memref<1x3x4x128xf32, #tpu.memory_space<vmem>>, vector<1x1x1x128xf32>
    %84 = vector.shape_cast %83 : vector<1x1x1x128xf32> to vector<128xf32>
    %cst_89 = arith.constant dense<0.000000e+00> : vector<128xf32>
    %85 = vector.multi_reduction <add>, %67, %cst_89 [0] : vector<32x128xf32> to vector<128xf32>
    %86 = arith.addf %84, %85 : vector<128xf32>
    %c0_90 = arith.constant 0 : index
    %c2_91 = arith.constant 2 : index
    %c2_92 = arith.constant 2 : index
    %c0_93 = arith.constant 0 : index
    %87 = vector.load %arg4[%c0_90, %c2_91, %c2_92, %c0_93] : memref<1x3x4x128xf32, #tpu.memory_space<vmem>>, vector<1x1x1x128xf32>
    %88 = vector.shape_cast %87 : vector<1x1x1x128xf32> to vector<128xf32>
    %89 = vector.shape_cast %86 : vector<128xf32> to vector<1x1x1x128xf32>
    tpu.vector_store %arg4[%c0_90, %c2_91, %c2_92, %c0_93], %89 {strides = array<i32>} : memref<1x3x4x128xf32, #tpu.memory_space<vmem>>, vector<1x1x1x128xf32>,
    %c0_94 = arith.constant 0 : index
    %c3 = arith.constant 3 : index
    %c0_95 = arith.constant 0 : index
    %c0_96 = arith.constant 0 : index
    %90 = vector.load %arg2[%c0_94, %c3, %c0_95, %c0_96] : memref<1x4x32x128xf32, #tpu.memory_space<vmem>>, vector<1x1x32x128xf32>
    %91 = vector.shape_cast %90 : vector<1x1x32x128xf32> to vector<32x128xf32>
    %c3_i32 = arith.constant 3 : i32
    %92 = vector.broadcast %c3_i32 : i32 to vector<32x128xi32>
    %93 = arith.cmpi eq, %5, %92 : vector<32x128xi32>
    %94 = arith.extui %93 : vector<32x128xi1> to vector<32x128xi32>
    %95 = arith.sitofp %94 : vector<32x128xi32> to vector<32x128xf32>
    %c0_97 = arith.constant 0 : index
    %c0_98 = arith.constant 0 : index
    %c3_99 = arith.constant 3 : index
    %c0_100 = arith.constant 0 : index
    %96 = vector.load %arg4[%c0_97, %c0_98, %c3_99, %c0_100] : memref<1x3x4x128xf32, #tpu.memory_space<vmem>>, vector<1x1x1x128xf32>
    %97 = vector.shape_cast %96 : vector<1x1x1x128xf32> to vector<128xf32>
    %98 = arith.mulf %91, %95 : vector<32x128xf32>
    %cst_101 = arith.constant dense<0.000000e+00> : vector<128xf32>
    %99 = vector.multi_reduction <add>, %98, %cst_101 [0] : vector<32x128xf32> to vector<128xf32>
    %100 = arith.addf %97, %99 : vector<128xf32>
    %c0_102 = arith.constant 0 : index
    %c0_103 = arith.constant 0 : index
    %c3_104 = arith.constant 3 : index
    %c0_105 = arith.constant 0 : index
    %101 = vector.load %arg4[%c0_102, %c0_103, %c3_104, %c0_105] : memref<1x3x4x128xf32, #tpu.memory_space<vmem>>, vector<1x1x1x128xf32>
    %102 = vector.shape_cast %101 : vector<1x1x1x128xf32> to vector<128xf32>
    %103 = vector.shape_cast %100 : vector<128xf32> to vector<1x1x1x128xf32>
    tpu.vector_store %arg4[%c0_102, %c0_103, %c3_104, %c0_105], %103 {strides = array<i32>} : memref<1x3x4x128xf32, #tpu.memory_space<vmem>>, vector<1x1x1x128xf32>,
    %c0_106 = arith.constant 0 : index
    %c1_107 = arith.constant 1 : index
    %c3_108 = arith.constant 3 : index
    %c0_109 = arith.constant 0 : index
    %104 = vector.load %arg4[%c0_106, %c1_107, %c3_108, %c0_109] : memref<1x3x4x128xf32, #tpu.memory_space<vmem>>, vector<1x1x1x128xf32>
    %105 = vector.shape_cast %104 : vector<1x1x1x128xf32> to vector<128xf32>
    %cst_110 = arith.constant dense<0.000000e+00> : vector<128xf32>
    %106 = vector.multi_reduction <add>, %91, %cst_110 [0] : vector<32x128xf32> to vector<128xf32>
    %107 = arith.addf %105, %106 : vector<128xf32>
    %c0_111 = arith.constant 0 : index
    %c1_112 = arith.constant 1 : index
    %c3_113 = arith.constant 3 : index
    %c0_114 = arith.constant 0 : index
    %108 = vector.load %arg4[%c0_111, %c1_112, %c3_113, %c0_114] : memref<1x3x4x128xf32, #tpu.memory_space<vmem>>, vector<1x1x1x128xf32>
    %109 = vector.shape_cast %108 : vector<1x1x1x128xf32> to vector<128xf32>
    %110 = vector.shape_cast %107 : vector<128xf32> to vector<1x1x1x128xf32>
    tpu.vector_store %arg4[%c0_111, %c1_112, %c3_113, %c0_114], %110 {strides = array<i32>} : memref<1x3x4x128xf32, #tpu.memory_space<vmem>>, vector<1x1x1x128xf32>,
    %c0_115 = arith.constant 0 : index
    %c2_116 = arith.constant 2 : index
    %c3_117 = arith.constant 3 : index
    %c0_118 = arith.constant 0 : index
    %111 = vector.load %arg4[%c0_115, %c2_116, %c3_117, %c0_118] : memref<1x3x4x128xf32, #tpu.memory_space<vmem>>, vector<1x1x1x128xf32>
    %112 = vector.shape_cast %111 : vector<1x1x1x128xf32> to vector<128xf32>
    %cst_119 = arith.constant dense<0.000000e+00> : vector<128xf32>
    %113 = vector.multi_reduction <add>, %95, %cst_119 [0] : vector<32x128xf32> to vector<128xf32>
    %114 = arith.addf %112, %113 : vector<128xf32>
    %c0_120 = arith.constant 0 : index
    %c2_121 = arith.constant 2 : index
    %c3_122 = arith.constant 3 : index
    %c0_123 = arith.constant 0 : index
    %115 = vector.load %arg4[%c0_120, %c2_121, %c3_122, %c0_123] : memref<1x3x4x128xf32, #tpu.memory_space<vmem>>, vector<1x1x1x128xf32>
    %116 = vector.shape_cast %115 : vector<1x1x1x128xf32> to vector<128xf32>
    %117 = vector.shape_cast %114 : vector<128xf32> to vector<1x1x1x128xf32>
    tpu.vector_store %arg4[%c0_120, %c2_121, %c3_122, %c0_123], %117 {strides = array<i32>} : memref<1x3x4x128xf32, #tpu.memory_space<vmem>>, vector<1x1x1x128xf32>,
    return
  }
  func.func @transform_0(%arg0: i32, %arg1: i32) -> (i32, i32, i32, i32) {
    %c0_i32 = arith.constant 0 : i32
    %c0_i32_0 = arith.constant 0 : i32
    %c0_i32_1 = arith.constant 0 : i32
    return %arg0, %c0_i32, %arg1, %c0_i32_0 : i32, i32, i32, i32
  }
  func.func @transform_1(%arg0: i32, %arg1: i32) -> (i32, i32, i32) {
    %c0_i32 = arith.constant 0 : i32
    %c0_i32_0 = arith.constant 0 : i32
    return %arg0, %arg1, %c0_i32 : i32, i32, i32
  }
  func.func @transform_2(%arg0: i32, %arg1: i32) -> (i32, i32, i32, i32) {
    %c0_i32 = arith.constant 0 : i32
    %c0_i32_0 = arith.constant 0 : i32
    %c0_i32_1 = arith.constant 0 : i32
    %c0_i32_2 = arith.constant 0 : i32
    return %arg0, %c0_i32, %c0_i32_0, %c0_i32_1 : i32, i32, i32, i32
  }
}

</mosaic_0001>

<llo_original>
// kernel: memory_efficient_soft_dice_loss.1
$region0: #{memory_efficient_soft_dice_loss.1}
  #allocation0 [shape = 'u32[]', space=smem, size = 0x4, offset = 0x4, fixed_abs, tag = 'smem constant byte address 0x4 - core index']
  #allocation1 [shape = 'u32[144,128]{1,0:T(1,128)}', space=vmem, size = 0x12000, scoped, tag = 'internal scratch']
  %s0 = inlined_call_operand.vmem [shape: f32[2,4,96,128], index: 0, kind: input, shape index: {}]
  %s1 = inlined_call_operand.vmem [shape: s8[2,96,128], index: 1, kind: input, shape index: {}]
  %s2 = inlined_call_operand.vmem [shape: f32[2,3,4,128], index: 2, kind: output, shape index: {}]
  %s3 = sld [smem:[#allocation0]]
  $region83: #{memory_efficient_soft_dice_loss.1} parent=0
    _
  %s5 = ssub.s32 1, %s3
  %s6 = scalar_select 0, %s5, %s3
  $region1: #{memory_efficient_soft_dice_loss.1} parent=0
    #allocation2 [shape = 'u8[131072]{0}', space=vmem, size = 0x20000, scoped, tag = 'input window, operand 0']
    loop: start=0, step=1, limit=8
    $region2: #{memory_efficient_soft_dice_loss.1} parent=1 // loop_pre_header
      _
    $region3: #{memory_efficient_soft_dice_loss.1} parent=1 // loop_header
      %s8 = sphi 0, %s12
      %p9 = scmp.ge.s32.totalorder %s8, 8
      %s15 = sphi 0, %s27
      %s16 = sphi 0, %s23
      %s17 = sphi 0, %s15
      %s18 = sphi 0, %s16
      %s19 = sphi 0, %s17
      %s20 = sphi 0, %s18
      %s32 = sphi 0, %s34
      %s35 = sphi 0, %s32
      %s36 = sphi 0, %s35
      %s52 = sphi 0, %s36
      %s60 = sphi 0, %s62
      %s63 = sphi 0, %s60
      %s64 = sphi 0, %s63
      %s80 = sphi 0, %s64
      %s86 = sphi 0, %s88
      %s89 = sphi 0, %s86
      %s90 = sphi 0, %s89
      %s106 = sphi 0, %s90
    $region4: #{memory_efficient_soft_dice_loss.1} parent=1 // loop_header_branch
      %11 = sbr.rel (%p9) target = $region8
    $region5: #{memory_efficient_soft_dice_loss.1} parent=1 // loop_body
      %s13 = ssub.s32 %s8, 1
      %s14 = ssub.s32 %s8, 2
      %s21 = sadd.s32 1, %s16
      %p22 = scmp.ge.s32.totalorder %s21, 3
      %s23 = scalar_select %p22, 0, %s21
      %s24 = sadd.s32 1, %s15
      %s25 = scalar_select %p22, %s24, %s15
      %p26 = scmp.ge.s32.totalorder %s25, 2
      %s27 = scalar_select %p26, 0, %s25
      %s28 = ssub.s32 %s15, %s27
      %s29 = ssub.s32 %s16, %s23
      %s30 = sor.u32 %s28, %s29
      %p31 = scmp.eq.s32.totalorder %s30, 0
      %s33 = sadd.s32 %s32, 1
      %s34 = scalar_select %p31, %s32, %s33
      %p37 = pneg %p31
      %p38 = scmp.eq.s32.totalorder %s8, 5
      %p39 = por %p37, %p38
      %p40 = scmp.ne.s32.totalorder %s32, %s35
      %p41 = scmp.eq.s32.totalorder %s8, 0
      %p42 = por %p40, %p41
      %p43 = scmp.ne.s32.totalorder %s32, %s35
      %p44 = scmp.eq.s32.totalorder %s13, 5
      %p45 = por %p43, %p44
      %p46 = scmp.ne.s32.totalorder %s35, %s36
      %p47 = scmp.eq.s32.totalorder %s13, 0
      %p48 = por %p46, %p47
      %p49 = scmp.ne.s32.totalorder %s35, %s36
      %p50 = scmp.eq.s32.totalorder %s14, 5
      %p51 = por %p49, %p50
      %p53 = scmp.ne.s32.totalorder %s36, %s52
      %p54 = scmp.eq.s32.totalorder %s14, 0
      %p55 = por %p53, %p54
      %s56 = ssub.s32 %s15, %s27
      %s57 = ssub.s32 %s16, %s23
      %s58 = sor.u32 %s56, %s57
      %p59 = scmp.eq.s32.totalorder %s58, 0
      %s61 = sadd.s32 %s60, 1
      %s62 = scalar_select %p59, %s60, %s61
      %p65 = pneg %p59
      %p66 = scmp.eq.s32.totalorder %s8, 5
      %p67 = por %p65, %p66
      %p68 = scmp.ne.s32.totalorder %s60, %s63
      %p69 = scmp.eq.s32.totalorder %s8, 0
      %p70 = por %p68, %p69
      %p71 = scmp.ne.s32.totalorder %s60, %s63
      %p72 = scmp.eq.s32.totalorder %s13, 5
      %p73 = por %p71, %p72
      %p74 = scmp.ne.s32.totalorder %s63, %s64
      %p75 = scmp.eq.s32.totalorder %s13, 0
      %p76 = por %p74, %p75
      %p77 = scmp.ne.s32.totalorder %s63, %s64
      %p78 = scmp.eq.s32.totalorder %s14, 5
      %p79 = por %p77, %p78
      %p81 = scmp.ne.s32.totalorder %s64, %s80
      %p82 = scmp.eq.s32.totalorder %s14, 0
      %p83 = por %p81, %p82
      %s84 = ssub.s32 %s15, %s27
      %p85 = scmp.eq.s32.totalorder %s84, 0
      %s87 = sadd.s32 %s86, 1
      %s88 = scalar_select %p85, %s86, %s87
      %p91 = pneg %p85
      %p92 = scmp.eq.s32.totalorder %s8, 5
      %p93 = por %p91, %p92
      %p94 = scmp.ne.s32.totalorder %s86, %s89
      %p95 = scmp.eq.s32.totalorder %s8, 0
      %p96 = por %p94, %p95
      %p97 = scmp.ne.s32.totalorder %s86, %s89
      %p98 = scmp.eq.s32.totalorder %s13, 5
      %p99 = por %p97, %p98
      %p100 = scmp.ne.s32.totalorder %s89, %s90
      %p101 = scmp.eq.s32.totalorder %s13, 0
      %p102 = por %p100, %p101
      %p103 = scmp.ne.s32.totalorder %s89, %s90
      %p104 = scmp.eq.s32.totalorder %s14, 5
      %p105 = por %p103, %p104
      %p107 = scmp.ne.s32.totalorder %s90, %s106
      %p108 = scmp.eq.s32.totalorder %s14, 0
      %p109 = por %p107, %p108
      %p110 = scmp.le.s32.totalorder 1, %s8
      %p111 = scmp.lt.s32.totalorder %s8, 7
      %p112 = pnand %p110, %p111
      %p113 = pneg %p112
      // Predicated region
      $region9: #{memory_efficient_soft_dice_loss.1} parent=5 // pred_check
        _
      $region10: #{memory_efficient_soft_dice_loss.1} parent=5 // pred_check_branch
        %115 = sbr.rel (%p112) target = $region12
      $region11: #{memory_efficient_soft_dice_loss.1} parent=5 // pred_region
        %s116 = ssub.s32 %s8, 1
      $region12: #{memory_efficient_soft_dice_loss.1} parent=5 // pred_fallthru
        _
      %p117 = scmp.lt.s32.totalorder %s8, 6
      // Predicated region
      $region13: #{memory_efficient_soft_dice_loss.1} parent=5 // pred_check
        %p118 = pneg %p117
      $region14: #{memory_efficient_soft_dice_loss.1} parent=5 // pred_check_branch
        %120 = sbr.rel (%p118) target = $region16
      $region15: #{memory_efficient_soft_dice_loss.1} parent=5 // pred_region
        // Predicated region
        $region17: #{memory_efficient_soft_dice_loss.1} parent=15 // pred_check
          %p121 = pneg %p42
        $region18: #{memory_efficient_soft_dice_loss.1} parent=15 // pred_check_branch
          %123 = sbr.rel (%p121) target = $region20
        $region19: #{memory_efficient_soft_dice_loss.1} parent=15 // pred_region
          %s124 = sand.u32 %s32, 1
          %s125 = sand.u32 %s32, 1
          %s126 = smul.addr %s125, 128
          %s127 = scalar_lea.vmem [#allocation2], %s126
          %s128 = smul.u32 4, %s16
          %s129 = smul.addr %s15, 48
          %s130 = sadd.s32 %s128, %s129
          %s131 = smul.addr %s130, 8
          %s132 = scalar_lea.vmem %s0, %s131
          // Predicated region
          $region21: #{memory_efficient_soft_dice_loss.1} parent=19 // pred_check
            _
          $region22: #{memory_efficient_soft_dice_loss.1} parent=19 // pred_check_branch
            %134 = sbr.rel (0) target = $region24
          $region23: #{memory_efficient_soft_dice_loss.1} parent=19 // pred_region
            // Predicated region
            $region25: #{memory_efficient_soft_dice_loss.1} parent=23 // pred_check
              _
            $region26: #{memory_efficient_soft_dice_loss.1} parent=23 // pred_check_branch
              %136 = sbr.rel (0) target = $region28
            $region27: #{memory_efficient_soft_dice_loss.1} parent=23 // pred_region
              // Predicated region
              $region40: #{memory_efficient_soft_dice_loss.1} parent=27 // pred_check
                _
              $region41: #{memory_efficient_soft_dice_loss.1} parent=27 // pred_check_branch
                %181 = sbr.rel (0) target = $region43
              $region42: #{memory_efficient_soft_dice_loss.1} parent=27 // pred_region
                loop: start=0, step=1, limit=1
                $region44: #{memory_efficient_soft_dice_loss.1} parent=42 // loop_pre_header
                  _
                $region45: #{memory_efficient_soft_dice_loss.1} parent=42 // loop_header
                  %s183 = sphi 0, %s187
                  %p184 = scmp.ge.s32.totalorder %s183, 1
                  %s188 = sphi %s132, %s132
                  %s189 = sphi %s127, %s127
                $region46: #{memory_efficient_soft_dice_loss.1} parent=42 // loop_header_branch
                  %186 = sbr.rel (%p184) target = $region50
                $region47: #{memory_efficient_soft_dice_loss.1} parent=42 // loop_body
                  %v190 = vld [vmem:[%s188] sm:$0xff]
                  %191 = vst [vmem:[%s189] sm:$0xff] %v190
                  %v192 = vld [vmem:[%s188 + $0x8] sm:$0xff]
                  %193 = vst [vmem:[%s189 + $0x8] sm:$0xff] %v192
                  %v194 = vld [vmem:[%s188 + $0x10] sm:$0xff]
                  %195 = vst [vmem:[%s189 + $0x10] sm:$0xff] %v194
                  %v196 = vld [vmem:[%s188 + $0x18] sm:$0xff]
                  %197 = vst [vmem:[%s189 + $0x18] sm:$0xff] %v196
                  %v198 = vld [vmem:[%s188 + $0x60] sm:$0xff]
                  %199 = vst [vmem:[%s189 + $0x20] sm:$0xff] %v198
                  %v200 = vld [vmem:[%s188 + $0x68] sm:$0xff]
                  %201 = vst [vmem:[%s189 + $0x28] sm:$0xff] %v200
                  %v202 = vld [vmem:[%s188 + $0x70] sm:$0xff]
                  %203 = vst [vmem:[%s189 + $0x30] sm:$0xff] %v202
                  %v204 = vld [vmem:[%s188 + $0x78] sm:$0xff]
                  %205 = vst [vmem:[%s189 + $0x38] sm:$0xff] %v204
                  %v206 = vld [vmem:[%s188 + $0xc0] sm:$0xff]
                  %207 = vst [vmem:[%s189 + $0x40] sm:$0xff] %v206
                  %v208 = vld [vmem:[%s188 + $0xc8] sm:$0xff]
                  %209 = vst [vmem:[%s189 + $0x48] sm:$0xff] %v208
                  %v210 = vld [vmem:[%s188 + $0xd0] sm:$0xff]
                  %211 = vst [vmem:[%s189 + $0x50] sm:$0xff] %v210
                  %v212 = vld [vmem:[%s188 + $0xd8] sm:$0xff]
                  %213 = vst [vmem:[%s189 + $0x58] sm:$0xff] %v212
                  %v214 = vld [vmem:[%s188 + $0x120] sm:$0xff]
                  %215 = vst [vmem:[%s189 + $0x60] sm:$0xff] %v214
                  %v216 = vld [vmem:[%s188 + $0x128] sm:$0xff]
                  %217 = vst [vmem:[%s189 + $0x68] sm:$0xff] %v216
                  %v218 = vld [vmem:[%s188 + $0x130] sm:$0xff]
                  %219 = vst [vmem:[%s189 + $0x70] sm:$0xff] %v218
                  %v220 = vld [vmem:[%s188 + $0x138] sm:$0xff]
                  %221 = vst [vmem:[%s189 + $0x78] sm:$0xff] %v220
                $region48: #{memory_efficient_soft_dice_loss.1} parent=42 // loop_footer
                  %s187 = sadd.s32 1, %s183
                $region49: #{memory_efficient_soft_dice_loss.1} parent=42 // loop_footer_branch
                  %182 = sbr.rel target = $region45
                $region50: #{memory_efficient_soft_dice_loss.1} parent=42 // loop_exit
                  _
              $region43: #{memory_efficient_soft_dice_loss.1} parent=27 // pred_fallthru
                _
              // Predicated region
              $region51: #{memory_efficient_soft_dice_loss.1} parent=27 // pred_check
                _
              $region52: #{memory_efficient_soft_dice_loss.1} parent=27 // pred_check_branch
                %223 = sbr.rel target = $region54
              $region53: #{memory_efficient_soft_dice_loss.1} parent=27 // pred_region
                _
              $region54: #{memory_efficient_soft_dice_loss.1} parent=27 // pred_fallthru
                _
            $region28: #{memory_efficient_soft_dice_loss.1} parent=23 // pred_fallthru
              _
            // Predicated region
            $region29: #{memory_efficient_soft_dice_loss.1} parent=23 // pred_check
              _
            $region30: #{memory_efficient_soft_dice_loss.1} parent=23 // pred_check_branch
              %138 = sbr.rel target = $region32
            $region31: #{memory_efficient_soft_dice_loss.1} parent=23 // pred_region
              loop: start=0, step=1, limit=1
              $region33: #{memory_efficient_soft_dice_loss.1} parent=31 // loop_pre_header
                _
              $region34: #{memory_efficient_soft_dice_loss.1} parent=31 // loop_header
                %s141 = sphi 0, %s145
                %p142 = scmp.ge.s32.totalorder %s141, 1
                %s146 = sphi %s132, %s132
                %s147 = sphi %s127, %s127
              $region35: #{memory_efficient_soft_dice_loss.1} parent=31 // loop_header_branch
                %144 = sbr.rel (%p142) target = $region39
              $region36: #{memory_efficient_soft_dice_loss.1} parent=31 // loop_body
                %v148 = vld [vmem:[%s146] sm:$0xff]
                %149 = vst [vmem:[%s147] sm:$0xff] %v148
                %v150 = vld [vmem:[%s146 + $0x8] sm:$0xff]
                %151 = vst [vmem:[%s147 + $0x8] sm:$0xff] %v150
                %v152 = vld [vmem:[%s146 + $0x10] sm:$0xff]
                %153 = vst [vmem:[%s147 + $0x10] sm:$0xff] %v152
                %v154 = vld [vmem:[%s146 + $0x18] sm:$0xff]
                %155 = vst [vmem:[%s147 + $0x18] sm:$0xff] %v154
                %v156 = vld [vmem:[%s146 + $0x60] sm:$0xff]
                %157 = vst [vmem:[%s147 + $0x20] sm:$0xff] %v156
                %v158 = vld [vmem:[%s146 + $0x68] sm:$0xff]
                %159 = vst [vmem:[%s147 + $0x28] sm:$0xff] %v158
                %v160 = vld [vmem:[%s146 + $0x70] sm:$0xff]
                %161 = vst [vmem:[%s147 + $0x30] sm:$0xff] %v160
                %v162 = vld [vmem:[%s146 + $0x78] sm:$0xff]
                %163 = vst [vmem:[%s147 + $0x38] sm:$0xff] %v162
                %v164 = vld [vmem:[%s146 + $0xc0] sm:$0xff]
                %165 = vst [vmem:[%s147 + $0x40] sm:$0xff] %v164
                %v166 = vld [vmem:[%s146 + $0xc8] sm:$0xff]
                %167 = vst [vmem:[%s147 + $0x48] sm:$0xff] %v166
                %v168 = vld [vmem:[%s146 + $0xd0] sm:$0xff]
                %169 = vst [vmem:[%s147 + $0x50] sm:$0xff] %v168
                %v170 = vld [vmem:[%s146 + $0xd8] sm:$0xff]
                %171 = vst [vmem:[%s147 + $0x58] sm:$0xff] %v170
                %v172 = vld [vmem:[%s146 + $0x120] sm:$0xff]
                %173 = vst [vmem:[%s147 + $0x60] sm:$0xff] %v172
                %v174 = vld [vmem:[%s146 + $0x128] sm:$0xff]
                %175 = vst [vmem:[%s147 + $0x68] sm:$0xff] %v174
                %v176 = vld [vmem:[%s146 + $0x130] sm:$0xff]
                %177 = vst [vmem:[%s147 + $0x70] sm:$0xff] %v176
                %v178 = vld [vmem:[%s146 + $0x138] sm:$0xff]
                %179 = vst [vmem:[%s147 + $0x78] sm:$0xff] %v178
              $region37: #{memory_efficient_soft_dice_loss.1} parent=31 // loop_footer
                %s145 = sadd.s32 1, %s141
              $region38: #{memory_efficient_soft_dice_loss.1} parent=31 // loop_footer_branch
                %140 = sbr.rel target = $region34
              $region39: #{memory_efficient_soft_dice_loss.1} parent=31 // loop_exit
                _
            $region32: #{memory_efficient_soft_dice_loss.1} parent=23 // pred_fallthru
              _
          $region24: #{memory_efficient_soft_dice_loss.1} parent=19 // pred_fallthru
            _
          %224 = vnop
        $region20: #{memory_efficient_soft_dice_loss.1} parent=15 // pred_fallthru
          _
        // Predicated region
        $region55: #{memory_efficient_soft_dice_loss.1} parent=15 // pred_check
          %p225 = pneg %p70
        $region56: #{memory_efficient_soft_dice_loss.1} parent=15 // pred_check_branch
          %227 = sbr.rel (%p225) target = $region58
        $region57: #{memory_efficient_soft_dice_loss.1} parent=15 // pred_region
          %p228 = scmp.lt.s32.totalorder %s15, 1
          %s229 = scalar_select %p228, %s15, 1
          %p230 = scmp.lt.s32.totalorder %s16, 2
          %s231 = scalar_select %p230, %s16, 2
          %s232 = smul.addr %s229, 3
          %s233 = sadd.s32 %s231, %s232
          %s234 = smul.addr %s233, 8
          %s235 = scalar_lea.vmem %s1, %s234
        $region58: #{memory_efficient_soft_dice_loss.1} parent=15 // pred_fallthru
          _
      $region16: #{memory_efficient_soft_dice_loss.1} parent=5 // pred_fallthru
        _
      %p236 = scmp.le.s32.totalorder 1, %s8
      %p237 = scmp.lt.s32.totalorder %s8, 7
      %p238 = pnand %p236, %p237
      %p239 = pneg %p238
      // Predicated region
      $region59: #{memory_efficient_soft_dice_loss.1} parent=5 // pred_check
        _
      $region60: #{memory_efficient_soft_dice_loss.1} parent=5 // pred_check_branch
        %241 = sbr.rel (%p238) target = $region62
      $region61: #{memory_efficient_soft_dice_loss.1} parent=5 // pred_region
        %s242 = ssub.s32 %s8, 1
        %s243 = sand.u32 %s35, 1
        %s244 = sand.u32 %s35, 1
        %s245 = smul.addr %s244, 128
        %s246 = scalar_lea.vmem [#allocation2], %s245
        // Predicated region
        $region63: #{memory_efficient_soft_dice_loss.1} parent=61 // pred_check
          %p247 = pneg %p48
        $region64: #{memory_efficient_soft_dice_loss.1} parent=61 // pred_check_branch
          %249 = sbr.rel (%p247) target = $region66
        $region65: #{memory_efficient_soft_dice_loss.1} parent=61 // pred_region
          _
        $region66: #{memory_efficient_soft_dice_loss.1} parent=61 // pred_fallthru
          _
        %s250 = sand.u32 %s35, 1
        %s251 = sand.u32 %s35, 1
        %s252 = smul.addr %s251, 128
        %s253 = scalar_lea.vmem [#allocation2], %s252
        %p254 = pneg %p48
        %p255 = pneg %p45
        %p256 = scmp.lt.s32.totalorder %s17, 1
        %s257 = scalar_select %p256, %s17, 1
        %p258 = scmp.lt.s32.totalorder %s18, 2
        %s259 = scalar_select %p258, %s18, 2
        %s260 = smul.addr %s257, 3
        %s261 = sadd.s32 %s259, %s260
        %s262 = smul.addr %s261, 8
        %s263 = scalar_lea.vmem %s1, %s262
        %p264 = pneg %p76
        %p265 = pneg %p73
        %p266 = pneg %p102
        %p267 = pneg %p99
        %p268 = scmp.lt.s32.totalorder %s17, 1
        %s269 = scalar_select %p268, %s17, 1
        %s270 = smul.addr %s269, 3
        %s271 = smul.addr %s270, 4
        %s272 = scalar_lea.vmem %s2, %s271
        %s273 = smul.u32 4, %s18
        %p274 = scmp.lt.s32.totalorder %s17, 1
        %s275 = scalar_select %p274, %s17, 1
        %p276 = scmp.lt.s32.totalorder %s18, 2
        %s277 = scalar_select %p276, %s18, 2
        %s278 = smul.addr %s275, 3
        %s279 = sadd.s32 %s277, %s278
        %s280 = smul.addr %s279, 8
        %s281 = scalar_lea.vmem %s1, %s280
        %p282 = scmp.lt.s32.totalorder %s17, 1
        %s283 = scalar_select %p282, %s17, 1
        %s284 = smul.addr %s283, 3
        %s285 = smul.addr %s284, 4
        %s286 = scalar_lea.vmem %s2, %s285
        %p287 = scmp.eq.s32.totalorder %s18, 0
        // Predicated region
        $region67: #{memory_efficient_soft_dice_loss.1} parent=61 // pred_check
          %p288 = pneg %p287
        $region68: #{memory_efficient_soft_dice_loss.1} parent=61 // pred_check_branch
          %290 = sbr.rel (%p288) target = $region70
        $region69: #{memory_efficient_soft_dice_loss.1} parent=61 // pred_region
          %291 = vst [vmem:[%s286] sm:$0xf] 0.0
          %292 = vst [vmem:[%s286 + $0x4] sm:$0xf] 0.0
          %293 = vst [vmem:[%s286 + $0x8] sm:$0xf] 0.0
        $region70: #{memory_efficient_soft_dice_loss.1} parent=61 // pred_fallthru
          _
        %v294 = vld [vmem:[%s281] sm:$0xff]
        %v295 = vunpack.c.0.s8 %v294
        %v296 = vunpack.c.1.s8 %v294
        %v297 = vunpack.c.2.s8 %v294
        %v298 = vunpack.c.3.s8 %v294
        %v299 = vld [vmem:[%s246] sm:$0xff]
        %v300 = vld [vmem:[%s246 + $0x8] sm:$0xff]
        %v301 = vld [vmem:[%s246 + $0x10] sm:$0xff]
        %v302 = vld [vmem:[%s246 + $0x18] sm:$0xff]
        %vm303 = vcmp.eq.s32.totalorder %v295, 0
        %vm304 = vcmp.eq.s32.totalorder %v296, 0
        %vm305 = vcmp.eq.s32.totalorder %v297, 0
        %vm306 = vcmp.eq.s32.totalorder %v298, 0
        %v307 = vsel %vm303, 1, 0
        %v308 = vsel %vm304, 1, 0
        %v309 = vsel %vm305, 1, 0
        %v310 = vsel %vm306, 1, 0
        %v311 = vcvt.s32.f32 %v307
        %v312 = vcvt.s32.f32 %v308
        %v313 = vcvt.s32.f32 %v309
        %v314 = vcvt.s32.f32 %v310
        %v315 = vld [vmem:[%s286] sm:$0x1]
        %v316 = vmul.f32 %v299, %v311
        %v317 = vmul.f32 %v300, %v312
        %v318 = vmul.f32 %v301, %v313
        %v319 = vmul.f32 %v302, %v314
        %v320 = vadd.f32 %v316, %v317
        %v321 = vadd.f32 %v320, %v318
        %v322 = vadd.f32 %v321, %v319
        %v323 = vrot.slane %v322, 4
        %v324 = vadd.f32 %v322, %v323
        %v325 = vrot.slane %v324, 2
        %v326 = vadd.f32 %v324, %v325
        %v327 = vrot.slane %v326, 1
        %v328 = vadd.f32 %v326, %v327
        %v329 = vadd.f32 %v315, %v328
        %330 = vst [vmem:[%s286] sm:$0x1] %v329
        %s331 = scalar_lea.vmem %s286, 4
        %v332 = vld [vmem:[%s331] sm:$0x1]
        %v333 = vadd.f32 %v299, %v300
        %v334 = vadd.f32 %v333, %v301
        %v335 = vadd.f32 %v334, %v302
        %v336 = vrot.slane %v335, 4
        %v337 = vadd.f32 %v335, %v336
        %v338 = vrot.slane %v337, 2
        %v339 = vadd.f32 %v337, %v338
        %v340 = vrot.slane %v339, 1
        %v341 = vadd.f32 %v339, %v340
        %v342 = vadd.f32 %v332, %v341
        %343 = vst [vmem:[%s331] sm:$0x1] %v342
        %s344 = scalar_lea.vmem %s286, 8
        %v345 = vld [vmem:[%s344] sm:$0x1]
        %v346 = vadd.f32 %v311, %v312
        %v347 = vadd.f32 %v346, %v313
        %v348 = vadd.f32 %v347, %v314
        %v349 = vrot.slane %v348, 4
        %v350 = vadd.f32 %v348, %v349
        %v351 = vrot.slane %v350, 2
        %v352 = vadd.f32 %v350, %v351
        %v353 = vrot.slane %v352, 1
        %v354 = vadd.f32 %v352, %v353
        %v355 = vadd.f32 %v345, %v354
        %356 = vst [vmem:[%s344] sm:$0x1] %v355
        %s357 = scalar_lea.vmem %s246, 32 [#allocation2]
        %v358 = vld [vmem:[%s357] sm:$0xff]
        %v359 = vld [vmem:[%s357 + $0x8] sm:$0xff]
        %v360 = vld [vmem:[%s357 + $0x10] sm:$0xff]
        %v361 = vld [vmem:[%s357 + $0x18] sm:$0xff]
        %vm362 = vcmp.eq.s32.totalorder %v295, 1
        %vm363 = vcmp.eq.s32.totalorder %v296, 1
        %vm364 = vcmp.eq.s32.totalorder %v297, 1
        %vm365 = vcmp.eq.s32.totalorder %v298, 1
        %v366 = vsel %vm362, 1, 0
        %v367 = vsel %vm363, 1, 0
        %v368 = vsel %vm364, 1, 0
        %v369 = vsel %vm365, 1, 0
        %v370 = vcvt.s32.f32 %v366
        %v371 = vcvt.s32.f32 %v367
        %v372 = vcvt.s32.f32 %v368
        %v373 = vcvt.s32.f32 %v369
        %v374 = vld [vmem:[%s286 + $0x1] sm:$0x1]
        %v375 = vmul.f32 %v358, %v370
        %v376 = vmul.f32 %v359, %v371
        %v377 = vmul.f32 %v360, %v372
        %v378 = vmul.f32 %v361, %v373
        %v379 = vadd.f32 %v375, %v376
        %v380 = vadd.f32 %v379, %v377
        %v381 = vadd.f32 %v380, %v378
        %v382 = vrot.slane %v381, 4
        %v383 = vadd.f32 %v381, %v382
        %v384 = vrot.slane %v383, 2
        %v385 = vadd.f32 %v383, %v384
        %v386 = vrot.slane %v385, 1
        %v387 = vadd.f32 %v385, %v386
        %v388 = vadd.f32 %v374, %v387
        %389 = vst [vmem:[%s286 + $0x1] sm:$0x1] %v388
        %v390 = vld [vmem:[%s331 + $0x1] sm:$0x1]
        %v391 = vadd.f32 %v358, %v359
        %v392 = vadd.f32 %v391, %v360
        %v393 = vadd.f32 %v392, %v361
        %v394 = vrot.slane %v393, 4
        %v395 = vadd.f32 %v393, %v394
        %v396 = vrot.slane %v395, 2
        %v397 = vadd.f32 %v395, %v396
        %v398 = vrot.slane %v397, 1
        %v399 = vadd.f32 %v397, %v398
        %v400 = vadd.f32 %v390, %v399
        %401 = vst [vmem:[%s331 + $0x1] sm:$0x1] %v400
        %v402 = vld [vmem:[%s344 + $0x1] sm:$0x1]
        %v403 = vadd.f32 %v370, %v371
        %v404 = vadd.f32 %v403, %v372
        %v405 = vadd.f32 %v404, %v373
        %v406 = vrot.slane %v405, 4
        %v407 = vadd.f32 %v405, %v406
        %v408 = vrot.slane %v407, 2
        %v409 = vadd.f32 %v407, %v408
        %v410 = vrot.slane %v409, 1
        %v411 = vadd.f32 %v409, %v410
        %v412 = vadd.f32 %v402, %v411
        %413 = vst [vmem:[%s344 + $0x1] sm:$0x1] %v412
        %s414 = scalar_lea.vmem %s246, 64 [#allocation2]
        %v415 = vld [vmem:[%s414] sm:$0xff]
        %v416 = vld [vmem:[%s414 + $0x8] sm:$0xff]
        %v417 = vld [vmem:[%s414 + $0x10] sm:$0xff]
        %v418 = vld [vmem:[%s414 + $0x18] sm:$0xff]
        %vm419 = vcmp.eq.s32.totalorder %v295, 2
        %vm420 = vcmp.eq.s32.totalorder %v296, 2
        %vm421 = vcmp.eq.s32.totalorder %v297, 2
        %vm422 = vcmp.eq.s32.totalorder %v298, 2
        %v423 = vsel %vm419, 1, 0
        %v424 = vsel %vm420, 1, 0
        %v425 = vsel %vm421, 1, 0
        %v426 = vsel %vm422, 1, 0
        %v427 = vcvt.s32.f32 %v423
        %v428 = vcvt.s32.f32 %v424
        %v429 = vcvt.s32.f32 %v425
        %v430 = vcvt.s32.f32 %v426
        %v431 = vld [vmem:[%s286 + $0x2] sm:$0x1]
        %v432 = vmul.f32 %v415, %v427
        %v433 = vmul.f32 %v416, %v428
        %v434 = vmul.f32 %v417, %v429
        %v435 = vmul.f32 %v418, %v430
        %v436 = vadd.f32 %v432, %v433
        %v437 = vadd.f32 %v436, %v434
        %v438 = vadd.f32 %v437, %v435
        %v439 = vrot.slane %v438, 4
        %v440 = vadd.f32 %v438, %v439
        %v441 = vrot.slane %v440, 2
        %v442 = vadd.f32 %v440, %v441
        %v443 = vrot.slane %v442, 1
        %v444 = vadd.f32 %v442, %v443
        %v445 = vadd.f32 %v431, %v444
        %446 = vst [vmem:[%s286 + $0x2] sm:$0x1] %v445
        %v447 = vld [vmem:[%s331 + $0x2] sm:$0x1]
        %v448 = vadd.f32 %v415, %v416
        %v449 = vadd.f32 %v448, %v417
        %v450 = vadd.f32 %v449, %v418
        %v451 = vrot.slane %v450, 4
        %v452 = vadd.f32 %v450, %v451
        %v453 = vrot.slane %v452, 2
        %v454 = vadd.f32 %v452, %v453
        %v455 = vrot.slane %v454, 1
        %v456 = vadd.f32 %v454, %v455
        %v457 = vadd.f32 %v447, %v456
        %458 = vst [vmem:[%s331 + $0x2] sm:$0x1] %v457
        %v459 = vld [vmem:[%s344 + $0x2] sm:$0x1]
        %v460 = vadd.f32 %v427, %v428
        %v461 = vadd.f32 %v460, %v429
        %v462 = vadd.f32 %v461, %v430
        %v463 = vrot.slane %v462, 4
        %v464 = vadd.f32 %v462, %v463
        %v465 = vrot.slane %v464, 2
        %v466 = vadd.f32 %v464, %v465
        %v467 = vrot.slane %v466, 1
        %v468 = vadd.f32 %v466, %v467
        %v469 = vadd.f32 %v459, %v468
        %470 = vst [vmem:[%s344 + $0x2] sm:$0x1] %v469
        %s471 = scalar_lea.vmem %s246, 96 [#allocation2]
        %v472 = vld [vmem:[%s471] sm:$0xff]
        %v473 = vld [vmem:[%s471 + $0x8] sm:$0xff]
        %v474 = vld [vmem:[%s471 + $0x10] sm:$0xff]
        %v475 = vld [vmem:[%s471 + $0x18] sm:$0xff]
        %vm476 = vcmp.eq.s32.totalorder %v295, 3
        %vm477 = vcmp.eq.s32.totalorder %v296, 3
        %vm478 = vcmp.eq.s32.totalorder %v297, 3
        %vm479 = vcmp.eq.s32.totalorder %v298, 3
        %v480 = vsel %vm476, 1, 0
        %v481 = vsel %vm477, 1, 0
        %v482 = vsel %vm478, 1, 0
        %v483 = vsel %vm479, 1, 0
        %v484 = vcvt.s32.f32 %v480
        %v485 = vcvt.s32.f32 %v481
        %v486 = vcvt.s32.f32 %v482
        %v487 = vcvt.s32.f32 %v483
        %v488 = vld [vmem:[%s286 + $0x3] sm:$0x1]
        %v489 = vmul.f32 %v472, %v484
        %v490 = vmul.f32 %v473, %v485
        %v491 = vmul.f32 %v474, %v486
        %v492 = vmul.f32 %v475, %v487
        %v493 = vadd.f32 %v489, %v490
        %v494 = vadd.f32 %v493, %v491
        %v495 = vadd.f32 %v494, %v492
        %v496 = vrot.slane %v495, 4
        %v497 = vadd.f32 %v495, %v496
        %v498 = vrot.slane %v497, 2
        %v499 = vadd.f32 %v497, %v498
        %v500 = vrot.slane %v499, 1
        %v501 = vadd.f32 %v499, %v500
        %v502 = vadd.f32 %v488, %v501
        %503 = vst [vmem:[%s286 + $0x3] sm:$0x1] %v502
        %v504 = vld [vmem:[%s331 + $0x3] sm:$0x1]
        %v505 = vadd.f32 %v472, %v473
        %v506 = vadd.f32 %v505, %v474
        %v507 = vadd.f32 %v506, %v475
        %v508 = vrot.slane %v507, 4
        %v509 = vadd.f32 %v507, %v508
        %v510 = vrot.slane %v509, 2
        %v511 = vadd.f32 %v509, %v510
        %v512 = vrot.slane %v511, 1
        %v513 = vadd.f32 %v511, %v512
        %v514 = vadd.f32 %v504, %v513
        %515 = vst [vmem:[%s331 + $0x3] sm:$0x1] %v514
        %v516 = vld [vmem:[%s344 + $0x3] sm:$0x1]
        %v517 = vadd.f32 %v484, %v485
        %v518 = vadd.f32 %v517, %v486
        %v519 = vadd.f32 %v518, %v487
        %v520 = vrot.slane %v519, 4
        %v521 = vadd.f32 %v519, %v520
        %v522 = vrot.slane %v521, 2
        %v523 = vadd.f32 %v521, %v522
        %v524 = vrot.slane %v523, 1
        %v525 = vadd.f32 %v523, %v524
        %v526 = vadd.f32 %v516, %v525
        %527 = vst [vmem:[%s344 + $0x3] sm:$0x1] %v526
        %p528 = scmp.lt.s32.totalorder %s17, 1
        %s529 = scalar_select %p528, %s17, 1
        %s530 = smul.addr %s529, 3
        %s531 = smul.addr %s530, 4
        %s532 = scalar_lea.vmem %s2, %s531
        // Predicated region
        $region71: #{memory_efficient_soft_dice_loss.1} parent=61 // pred_check
          %p533 = pneg %p99
        $region72: #{memory_efficient_soft_dice_loss.1} parent=61 // pred_check_branch
          %535 = sbr.rel (%p533) target = $region74
        $region73: #{memory_efficient_soft_dice_loss.1} parent=61 // pred_region
          _
        $region74: #{memory_efficient_soft_dice_loss.1} parent=61 // pred_fallthru
          _
      $region62: #{memory_efficient_soft_dice_loss.1} parent=5 // pred_fallthru
        _
      %p536 = scmp.le.s32.totalorder 2, %s8
      // Predicated region
      $region75: #{memory_efficient_soft_dice_loss.1} parent=5 // pred_check
        %p537 = pneg %p536
      $region76: #{memory_efficient_soft_dice_loss.1} parent=5 // pred_check_branch
        %539 = sbr.rel (%p537) target = $region78
      $region77: #{memory_efficient_soft_dice_loss.1} parent=5 // pred_region
        %s540 = ssub.s32 %s8, 2
        // Predicated region
        $region79: #{memory_efficient_soft_dice_loss.1} parent=77 // pred_check
          %p541 = pneg %p105
        $region80: #{memory_efficient_soft_dice_loss.1} parent=77 // pred_check_branch
          %543 = sbr.rel (%p541) target = $region82
        $region81: #{memory_efficient_soft_dice_loss.1} parent=77 // pred_region
          %p544 = scmp.lt.s32.totalorder %s19, 1
          %s545 = scalar_select %p544, %s19, 1
          %s546 = smul.addr %s545, 3
          %s547 = smul.addr %s546, 4
          %s548 = scalar_lea.vmem %s2, %s547
        $region82: #{memory_efficient_soft_dice_loss.1} parent=77 // pred_fallthru
          _
      $region78: #{memory_efficient_soft_dice_loss.1} parent=5 // pred_fallthru
        _
    $region6: #{memory_efficient_soft_dice_loss.1} parent=1 // loop_footer
      %s12 = sadd.s32 1, %s8
    $region7: #{memory_efficient_soft_dice_loss.1} parent=1 // loop_footer_branch
      %7 = sbr.rel target = $region3
    $region8: #{memory_efficient_soft_dice_loss.1} parent=1 // loop_exit
      _

</llo_original>
